<compile_context>
chip_gen: v7x
topology: tpu7x:2x2x1
jax: 0.10.0
libtpu: 0.0.40
codegen_flags: <defaults>
</compile_context>

<pallas_src>
import jax
import jax.numpy as jnp
from jax.experimental import pallas as pl
from jax.experimental.pallas import tpu as pltpu

IN_F = 26       # real input features
HID = 50        # real hidden width
IN_PAD = 32     # padded K for fc1 (sublane friendly)
HID_PAD = 128   # padded hidden width (full vreg lane width)
OUT_PAD = 128   # padded output width (lane-dense stores)

DEFAULT_BLOCK_B = 8192  # upper bound on the batch tile


def cutsnet_kernel(x_ref, w1_ref, b1_ref, w2_ref, b2_ref, w3_ref, b3_ref, o_ref):
    # fc1 + ReLU  (bf16 MXU operands, f32 accumulation, f32 elementwise).
    # TODO(synk): on v6e/v7x the bias add + ReLU could run in bf16 (bf16 VALU),
    # but the kernel is HBM/overhead-bound, so f32 elementwise is kept on all
    # generations (also required on v5e, which has no bf16 VPU).
    h1 = jnp.dot(x_ref[...], w1_ref[...], preferred_element_type=jnp.float32)
    h1 = jnp.maximum(h1 + b1_ref[...], 0.0)
    # fc2 + ReLU
    h2 = jnp.dot(h1.astype(jnp.bfloat16), w2_ref[...],
                 preferred_element_type=jnp.float32)
    h2 = jnp.maximum(h2 + b2_ref[...], 0.0)
    # fc3 (no activation); final store is bf16 -> halves the dominant HBM write.
    out = jnp.dot(h2.astype(jnp.bfloat16), w3_ref[...],
                  preferred_element_type=jnp.float32)
    o_ref[...] = (out + b3_ref[...]).astype(o_ref.dtype)


def _round_up(n, m):
    return (n + m - 1) // m * m


def _pad_to(a, shape):
    pads = [(0, s - d) for d, s in zip(a.shape, shape)]
    return jnp.pad(a, pads)


def pack_params(params):
    """Zero-pad params to lane/sublane-friendly shapes; weights as bf16."""
    w1, b1, w2, b2, w3, b3 = params
    w1p = _pad_to(w1, (IN_PAD, HID_PAD)).astype(jnp.bfloat16)
    w2p = _pad_to(w2, (HID_PAD, HID_PAD)).astype(jnp.bfloat16)
    w3p = _pad_to(w3, (HID_PAD, OUT_PAD)).astype(jnp.bfloat16)
    b1p = _pad_to(b1, (1, HID_PAD)).astype(jnp.float32)
    b2p = _pad_to(b2, (1, HID_PAD)).astype(jnp.float32)
    b3p = _pad_to(b3, (1, OUT_PAD)).astype(jnp.float32)
    return (w1p, b1p, w2p, b2p, w3p, b3p)


def _pick_batch_tiling(B, block_b):
    """Tile size (multiple of 16, bounded padding waste) and padded batch."""
    # Number of batch tiles: honor the block_b cap, and use >=2 tiles for
    # moderately large batches so ("parallel",) actually splits work across
    # both v7x TensorCores.
    n_tiles = max(pl.cdiv(B, block_b), 2 if B >= 1024 else 1)
    # bf16 native tile is (16, 128): keep the batch tile a multiple of 16 so
    # every load/store is an unmasked full-vreg access.  Rounding cdiv(B, n)
    # (rather than capping at block_b directly) keeps batch-padding waste
    # below 16 * n_tiles rows for any B (no ~2x blow-up for unlucky B).
    tb = _round_up(pl.cdiv(B, n_tiles), 16)
    b_pad = _round_up(B, tb)
    return tb, b_pad


def _vmem_limit_bytes(tb):
    """Scoped-VMEM request: double-buffered streamed tiles + f32 temporaries."""
    stream = 2 * tb * IN_PAD * 2 + 2 * tb * OUT_PAD * 2          # bf16 x / out
    temps = 3 * tb * HID_PAD * 4                                 # h1, h2, out f32
    weights = (IN_PAD + 2 * HID_PAD) * HID_PAD * 2 + 3 * HID_PAD * 4
    # +8 MiB slack; cap below v7x's 64 MiB physical VMEM.
    return min(stream + temps + 2 * weights + (8 << 20), 48 << 20)


def cutsnet_forward_padded(x, packed_params, *, block_b=DEFAULT_BLOCK_B):
    """Core kernel call.

    x: (B, 26) float32 (or bf16).  packed_params: output of pack_params.
    Returns the padded (b_pad, 128) bf16 output; the real logits live in
    [:B, :action_size].  Consumers that can take the padded layout directly
    avoid an extra full pass over the output stream.
    """
    w1p, b1p, w2p, b2p, w3p, b3p = packed_params
    B = x.shape[0]
    tb, b_pad = _pick_batch_tiling(B, block_b)

    # Single fused pad of the bf16 cast: batch -> b_pad, features 26 -> 32.
    xp = jnp.pad(x.astype(jnp.bfloat16), ((0, b_pad - B), (0, IN_PAD - IN_F)))

    resident = lambda arr: pl.BlockSpec(arr.shape, lambda i: (0, 0))

    flops = 2 * b_pad * HID_PAD * (IN_PAD + HID_PAD + OUT_PAD)
    bytes_accessed = (
        b_pad * IN_PAD * 2 + b_pad * OUT_PAD * 2                  # x in, out (bf16)
        + (IN_PAD + 2 * HID_PAD) * HID_PAD * 2 + 3 * HID_PAD * 4  # weights/biases
    )

    return pl.pallas_call(
        cutsnet_kernel,
        out_shape=jax.ShapeDtypeStruct((b_pad, OUT_PAD), jnp.bfloat16),
        grid=(b_pad // tb,),
        in_specs=[
            pl.BlockSpec((tb, IN_PAD), lambda i: (i, 0)),   # x: streamed tiles
            resident(w1p), resident(b1p),                   # weights/biases:
            resident(w2p), resident(b2p),                   # VMEM-resident
            resident(w3p), resident(b3p),                   # across grid steps
        ],
        out_specs=pl.BlockSpec((tb, OUT_PAD), lambda i: (i, 0)),
        compiler_params=pltpu.CompilerParams(
            dimension_semantics=("parallel",),
            vmem_limit_bytes=_vmem_limit_bytes(tb)),
        cost_estimate=pl.CostEstimate(
            flops=flops, transcendentals=0, bytes_accessed=bytes_accessed),
    )(xp, w1p, b1p, w2p, b2p, w3p, b3p)


def cutsnet_forward(x, params, *, block_b=DEFAULT_BLOCK_B):
    """Convenience wrapper: (B, 26) f32 -> (B, action_size) f32 logits."""
    B = x.shape[0]
    A = params[4].shape[1]  # action_size (w3 out dim)
    out_padded = cutsnet_forward_padded(x, pack_params(params), block_b=block_b)
    return out_padded[:B, :A].astype(jnp.float32)


def init_params(key, action_size):
    """Deterministic synthetic init mimicking nn.Linear shapes (26->50->50->A)."""
    k = jax.random.split(key, 6)

    def linear(kw, kb, fan_in, fan_out):
        bound = 1.0 / (fan_in ** 0.5)
        w = jax.random.uniform(kw, (fan_in, fan_out), jnp.float32, -bound, bound)
        b = jax.random.uniform(kb, (1, fan_out), jnp.float32, -bound, bound)
        return w, b

    w1, b1 = linear(k[0], k[1], IN_F, HID)
    w2, b2 = linear(k[2], k[3], HID, HID)
    w3, b3 = linear(k[4], k[5], HID, action_size)
    return (w1, b1, w2, b2, w3, b3)


def reference_forward(x, params):
    w1, b1, w2, b2, w3, b3 = params
    h1 = jnp.maximum(x @ w1 + b1, 0.0)
    h2 = jnp.maximum(h1 @ w2 + b2, 0.0)
    return h2 @ w3 + b3


if __name__ == "__main__":
    key = jax.random.PRNGKey(0)
    k_x, k_p = jax.random.split(key)

    batch = 8
    action_size = 5  # small synthetic action space

    x = jax.random.normal(k_x, (batch, IN_F), dtype=jnp.float32)
    params = init_params(k_p, action_size)

    fwd = jax.jit(cutsnet_forward)
    out = jax.block_until_ready(fwd(x, params))

    ref = reference_forward(x, params)  # full f32 reference
    assert out.shape == (batch, action_size)
    # bf16 MXU operands + bf16 output store, f32 accumulation -> loosened tol.
    assert jnp.allclose(out, ref, atol=5e-2, rtol=5e-2), (
        f"max abs err {jnp.max(jnp.abs(out - ref))}")

    print("KERNEL_OK")
</pallas_src>

<mosaic_0001>
module attributes {stable_mosaic.version = 11 : i64} {
  func.func @cutsnet_kernel(%arg0: i32, %arg1: memref<16x32xbf16, #tpu.memory_space<vmem>>, %arg2: memref<32x128xbf16, #tpu.memory_space<vmem>>, %arg3: memref<1x128xf32, #tpu.memory_space<vmem>>, %arg4: memref<128x128xbf16, #tpu.memory_space<vmem>>, %arg5: memref<1x128xf32, #tpu.memory_space<vmem>>, %arg6: memref<128x128xbf16, #tpu.memory_space<vmem>>, %arg7: memref<1x128xf32, #tpu.memory_space<vmem>>, %arg8: memref<16x128xbf16, #tpu.memory_space<vmem>>) attributes {dimension_semantics = [#tpu.dimension_semantics<parallel>], iteration_bounds = array<i64: 1>, scalar_prefetch = 0 : i64, scratch_operands = 0 : i64, tpu.core_type = #tpu.core_type<tc>, window_params = [{transform_indices = @transform_0, window_bounds = array<i64: 16, 32>}, {pipeline_mode = #tpu.pipeline_mode<synchronous>, transform_indices = @transform_1, window_bounds = array<i64: 32, 128>}, {pipeline_mode = #tpu.pipeline_mode<synchronous>, transform_indices = @transform_2, window_bounds = array<i64: 1, 128>}, {pipeline_mode = #tpu.pipeline_mode<synchronous>, transform_indices = @transform_3, window_bounds = array<i64: 128, 128>}, {pipeline_mode = #tpu.pipeline_mode<synchronous>, transform_indices = @transform_4, window_bounds = array<i64: 1, 128>}, {pipeline_mode = #tpu.pipeline_mode<synchronous>, transform_indices = @transform_5, window_bounds = array<i64: 128, 128>}, {pipeline_mode = #tpu.pipeline_mode<synchronous>, transform_indices = @transform_6, window_bounds = array<i64: 1, 128>}, {transform_indices = @transform_7, window_bounds = array<i64: 16, 128>}]} {
    %c0 = arith.constant 0 : index
    %c0_0 = arith.constant 0 : index
    %0 = vector.load %arg1[%c0, %c0_0] : memref<16x32xbf16, #tpu.memory_space<vmem>>, vector<16x32xbf16>
    %c0_1 = arith.constant 0 : index
    %c0_2 = arith.constant 0 : index
    %1 = vector.load %arg2[%c0_1, %c0_2] : memref<32x128xbf16, #tpu.memory_space<vmem>>, vector<32x128xbf16>
    %cst = arith.constant dense<0.000000e+00> : vector<16x128xf32>
    %2 = tpu.matmul %0, %1, %cst {dimension_numbers = #tpu.dot_dimension_numbers<[1], [0], [0], [1], [0, 0, 1, 1], [], []>} : vector<16x32xbf16>, vector<32x128xbf16>, vector<16x128xf32> -> vector<16x128xf32>
    %c0_3 = arith.constant 0 : index
    %c0_4 = arith.constant 0 : index
    %3 = vector.load %arg3[%c0_3, %c0_4] : memref<1x128xf32, #tpu.memory_space<vmem>>, vector<1x128xf32>
    %4 = vector.broadcast %3 : vector<1x128xf32> to vector<16x128xf32>
    %5 = arith.addf %2, %4 : vector<16x128xf32>
    %cst_5 = arith.constant 0.000000e+00 : f32
    %6 = vector.broadcast %cst_5 : f32 to vector<16x128xf32>
    %7 = arith.maximumf %5, %6 : vector<16x128xf32>
    %8 = arith.truncf %7 : vector<16x128xf32> to vector<16x128xbf16>
    %c0_6 = arith.constant 0 : index
    %c0_7 = arith.constant 0 : index
    %9 = vector.load %arg4[%c0_6, %c0_7] : memref<128x128xbf16, #tpu.memory_space<vmem>>, vector<128x128xbf16>
    %cst_8 = arith.constant dense<0.000000e+00> : vector<16x128xf32>
    %10 = tpu.matmul %8, %9, %cst_8 {dimension_numbers = #tpu.dot_dimension_numbers<[1], [0], [0], [1], [0, 0, 1, 1], [], []>} : vector<16x128xbf16>, vector<128x128xbf16>, vector<16x128xf32> -> vector<16x128xf32>
    %c0_9 = arith.constant 0 : index
    %c0_10 = arith.constant 0 : index
    %11 = vector.load %arg5[%c0_9, %c0_10] : memref<1x128xf32, #tpu.memory_space<vmem>>, vector<1x128xf32>
    %12 = vector.broadcast %11 : vector<1x128xf32> to vector<16x128xf32>
    %13 = arith.addf %10, %12 : vector<16x128xf32>
    %cst_11 = arith.constant 0.000000e+00 : f32
    %14 = vector.broadcast %cst_11 : f32 to vector<16x128xf32>
    %15 = arith.maximumf %13, %14 : vector<16x128xf32>
    %16 = arith.truncf %15 : vector<16x128xf32> to vector<16x128xbf16>
    %c0_12 = arith.constant 0 : index
    %c0_13 = arith.constant 0 : index
    %17 = vector.load %arg6[%c0_12, %c0_13] : memref<128x128xbf16, #tpu.memory_space<vmem>>, vector<128x128xbf16>
    %cst_14 = arith.constant dense<0.000000e+00> : vector<16x128xf32>
    %18 = tpu.matmul %16, %17, %cst_14 {dimension_numbers = #tpu.dot_dimension_numbers<[1], [0], [0], [1], [0, 0, 1, 1], [], []>} : vector<16x128xbf16>, vector<128x128xbf16>, vector<16x128xf32> -> vector<16x128xf32>
    %c0_15 = arith.constant 0 : index
    %c0_16 = arith.constant 0 : index
    %19 = vector.load %arg7[%c0_15, %c0_16] : memref<1x128xf32, #tpu.memory_space<vmem>>, vector<1x128xf32>
    %20 = vector.broadcast %19 : vector<1x128xf32> to vector<16x128xf32>
    %21 = arith.addf %18, %20 : vector<16x128xf32>
    %22 = arith.truncf %21 : vector<16x128xf32> to vector<16x128xbf16>
    %c0_17 = arith.constant 0 : index
    %c0_18 = arith.constant 0 : index
    %23 = vector.load %arg8[%c0_17, %c0_18] : memref<16x128xbf16, #tpu.memory_space<vmem>>, vector<16x128xbf16>
    tpu.vector_store %arg8[%c0_17, %c0_18], %22 {strides = array<i32>} : memref<16x128xbf16, #tpu.memory_space<vmem>>, vector<16x128xbf16>,
    return
  }
  func.func @transform_0(%arg0: i32) -> (i32, i32) {
    %c0_i32 = arith.constant 0 : i32
    %c0_i32_0 = arith.constant 0 : i32
    return %arg0, %c0_i32 : i32, i32
  }
  func.func @transform_1(%arg0: i32) -> (i32, i32) {
    %c0_i32 = arith.constant 0 : i32
    %c0_i32_0 = arith.constant 0 : i32
    %c0_i32_1 = arith.constant 0 : i32
    return %c0_i32, %c0_i32_0 : i32, i32
  }
  func.func @transform_2(%arg0: i32) -> (i32, i32) {
    %c0_i32 = arith.constant 0 : i32
    %c0_i32_0 = arith.constant 0 : i32
    %c0_i32_1 = arith.constant 0 : i32
    return %c0_i32, %c0_i32_0 : i32, i32
  }
  func.func @transform_3(%arg0: i32) -> (i32, i32) {
    %c0_i32 = arith.constant 0 : i32
    %c0_i32_0 = arith.constant 0 : i32
    %c0_i32_1 = arith.constant 0 : i32
    return %c0_i32, %c0_i32_0 : i32, i32
  }
  func.func @transform_4(%arg0: i32) -> (i32, i32) {
    %c0_i32 = arith.constant 0 : i32
    %c0_i32_0 = arith.constant 0 : i32
    %c0_i32_1 = arith.constant 0 : i32
    return %c0_i32, %c0_i32_0 : i32, i32
  }
  func.func @transform_5(%arg0: i32) -> (i32, i32) {
    %c0_i32 = arith.constant 0 : i32
    %c0_i32_0 = arith.constant 0 : i32
    %c0_i32_1 = arith.constant 0 : i32
    return %c0_i32, %c0_i32_0 : i32, i32
  }
  func.func @transform_6(%arg0: i32) -> (i32, i32) {
    %c0_i32 = arith.constant 0 : i32
    %c0_i32_0 = arith.constant 0 : i32
    %c0_i32_1 = arith.constant 0 : i32
    return %c0_i32, %c0_i32_0 : i32, i32
  }
  func.func @transform_7(%arg0: i32) -> (i32, i32) {
    %c0_i32 = arith.constant 0 : i32
    %c0_i32_0 = arith.constant 0 : i32
    return %arg0, %c0_i32 : i32, i32
  }
}

</mosaic_0001>

<llo_original>
// kernel: cutsnet_forward.1
$region0: #{cutsnet_forward.1}
  #allocation0 [shape = 'u32[]', space=smem, size = 0x4, offset = 0x4, fixed_abs, tag = 'smem constant byte address 0x4 - core index']
  #allocation1 [shape = 'u32[144,128]{1,0:T(1,128)}', space=vmem, size = 0x12000, scoped, tag = 'internal scratch']
  %s0 = inlined_call_operand.vmem [shape: bf16[16,32], index: 0, kind: input, shape index: {}]
  %s1 = inlined_call_operand.vmem [shape: bf16[32,128], index: 1, kind: input, shape index: {}]
  %s2 = inlined_call_operand.vmem [shape: f32[1,128], index: 2, kind: input, shape index: {}]
  %s3 = inlined_call_operand.vmem [shape: bf16[128,128], index: 3, kind: input, shape index: {}]
  %s4 = inlined_call_operand.vmem [shape: f32[1,128], index: 4, kind: input, shape index: {}]
  %s5 = inlined_call_operand.vmem [shape: bf16[128,128], index: 5, kind: input, shape index: {}]
  %s6 = inlined_call_operand.vmem [shape: f32[1,128], index: 6, kind: input, shape index: {}]
  %s7 = inlined_call_operand.vmem [shape: bf16[16,128], index: 7, kind: output, shape index: {}]
  %s8 = sld [smem:[#allocation0]]
  $region38: #{cutsnet_forward.1} parent=0
    _
  %s10 = ssub.s32 1, %s8
  %s11 = scalar_select 0, %s10, %s8
  // Predicated region
  $region2: #{cutsnet_forward.1} parent=0 // pred_check
    _
  $region3: #{cutsnet_forward.1} parent=0 // pred_check_branch
    %13 = sbr.rel (0) target = $region5
  $region4: #{cutsnet_forward.1} parent=0 // pred_region
    _
  $region5: #{cutsnet_forward.1} parent=0 // pred_fallthru
    _
  // Predicated region
  $region6: #{cutsnet_forward.1} parent=0 // pred_check
    _
  $region7: #{cutsnet_forward.1} parent=0 // pred_check_branch
    %15 = sbr.rel (0) target = $region9
  $region8: #{cutsnet_forward.1} parent=0 // pred_region
    _
  $region9: #{cutsnet_forward.1} parent=0 // pred_fallthru
    _
  // Predicated region
  $region10: #{cutsnet_forward.1} parent=0 // pred_check
    _
  $region11: #{cutsnet_forward.1} parent=0 // pred_check_branch
    %17 = sbr.rel (0) target = $region13
  $region12: #{cutsnet_forward.1} parent=0 // pred_region
    _
  $region13: #{cutsnet_forward.1} parent=0 // pred_fallthru
    _
  // Predicated region
  $region14: #{cutsnet_forward.1} parent=0 // pred_check
    _
  $region15: #{cutsnet_forward.1} parent=0 // pred_check_branch
    %19 = sbr.rel (0) target = $region17
  $region16: #{cutsnet_forward.1} parent=0 // pred_region
    _
  $region17: #{cutsnet_forward.1} parent=0 // pred_fallthru
    _
  // Predicated region
  $region18: #{cutsnet_forward.1} parent=0 // pred_check
    _
  $region19: #{cutsnet_forward.1} parent=0 // pred_check_branch
    %21 = sbr.rel (0) target = $region21
  $region20: #{cutsnet_forward.1} parent=0 // pred_region
    _
  $region21: #{cutsnet_forward.1} parent=0 // pred_fallthru
    _
  // Predicated region
  $region22: #{cutsnet_forward.1} parent=0 // pred_check
    _
  $region23: #{cutsnet_forward.1} parent=0 // pred_check_branch
    %23 = sbr.rel (0) target = $region25
  $region24: #{cutsnet_forward.1} parent=0 // pred_region
    _
  $region25: #{cutsnet_forward.1} parent=0 // pred_fallthru
    _
  // Predicated region
  $region26: #{cutsnet_forward.1} parent=0 // pred_check
    _
  $region27: #{cutsnet_forward.1} parent=0 // pred_check_branch
    %25 = sbr.rel (0) target = $region29
  $region28: #{cutsnet_forward.1} parent=0 // pred_region
    _
  $region29: #{cutsnet_forward.1} parent=0 // pred_fallthru
    _
  %v27 = vld [vmem:[%s0] sm:$0xf]
  %v28 = vld [vmem:[%s0 + $0x4] sm:$0xf]
  %v29 = vld [vmem:[%s1] sm:$0xf]
  %v30 = vld [vmem:[%s1 + $0x4] sm:$0xf]
  %v31 = vld [vmem:[%s1 + $0x8] sm:$0xf]
  %v32 = vld [vmem:[%s1 + $0xc] sm:$0xf]
  %v33 = vld [vmem:[%s2] sm:$0x1]
  %v35 = vlaneseq
  %v36 = vshrl.u32 %v35, 7
  %v37 = vsub.s32 0, %v36
  %v38 = vrot.slane %v33, %v37
  %v42 = vunpack.c.l.b16 %v27
  %v43 = vunpack.c.l.b16 %v28
  %v44 = vpack.c.b16 %v43, %v42
  %v49 = vunpack.c.l.b16 %v29
  %v50 = vunpack.c.l.b16 %v30
  %v51 = vunpack.c.l.b16 %v31
  %v52 = vunpack.c.l.b16 %v32
  %v53 = vpack.c.b16 %v50, %v49
  %v54 = vpack.c.b16 %v52, %v51
  %vm57 = vcmask 261120
  %v59 = vsel %vm57, %v44, 0
  %61 = vmatprep.subr.bf16.mxu0 0
  %62 = vmatpush1.bf16.msra.mxu0 %v53
  %63 = vmatprep.subr.bf16.mxu0 0
  %64 = vmatpush1.bf16.msra.mxu0 %v54
  %65 = vmatprep.subr.bf16.mxu0 0
  %66 = vmatpush1.bf16.msra.mxu0 0
  %67 = vmatprep.subr.bf16.mxu0 0
  %68 = vmatpush1.bf16.msra.mxu0 0
  %69 = vmatprep.subr.bf16.mxu0 0
  %70 = vmatpush1.bf16.msra.mxu0 0
  %71 = vmatprep.subr.bf16.mxu0 0
  %72 = vmatpush1.bf16.msra.mxu0 0
  %73 = vmatprep.subr.bf16.mxu0 0
  %74 = vmatpush1.bf16.msra.mxu0 0
  %75 = vmatprep.subr.bf16.mxu0 0
  %76 = vmatpush1.bf16.msra.mxu0 0
  %77 = vmatprep.subr.bf16.mxu0 0
  %78 = vmatpush1.bf16.msra.mxu0 0
  %79 = vmatprep.subr.bf16.mxu0 0
  %80 = vmatpush1.bf16.msra.mxu0 0
  %81 = vmatprep.subr.bf16.mxu0 0
  %82 = vmatpush1.bf16.msra.mxu0 0
  %83 = vmatprep.subr.bf16.mxu0 0
  %84 = vmatpush1.bf16.msra.mxu0 0
  %85 = vmatprep.subr.bf16.mxu0 0
  %86 = vmatpush1.bf16.msra.mxu0 0
  %87 = vmatprep.subr.bf16.mxu0 0
  %88 = vmatpush1.bf16.msra.mxu0 0
  %89 = vmatprep.subr.bf16.mxu0 0
  %90 = vmatpush1.bf16.msra.mxu0 0
  %91 = vmatprep.subr.bf16.mxu0 0
  %92 = vmatpush1.bf16.msra.mxu0 0
  %93 = vmatprep.mubr.bf16.mxu0 0
  %94 = vmatmul.mubr.bf16.gmra.mrb[0].mxu0 %v59
  %v95 = vpop.f32.mrb[0].mxu0
  %v96 = vadd.f32 %v38, %v95
  %v97 = vpop.f32.mrb[0].mxu0
  %v98 = vpop.f32.mrb[0].mxu0
  %v99 = vadd.f32 %v38, %v98
  %v100 = vpop.f32.mrb[0].mxu0
  %101 = vdwg.mxu0
  %v102 = vmax.f32 %v96, 0.0
  %v103 = vmax.f32 %v99, 0.0
  %v104 = vpack.c.bf16 %v103, %v102
  %v105 = vld [vmem:[%s3] sm:$0xf]
  %v106 = vld [vmem:[%s3 + $0x4] sm:$0xf]
  %v107 = vld [vmem:[%s3 + $0x8] sm:$0xf]
  %v108 = vld [vmem:[%s3 + $0xc] sm:$0xf]
  %v109 = vld [vmem:[%s3 + $0x10] sm:$0xf]
  %v110 = vld [vmem:[%s3 + $0x14] sm:$0xf]
  %v111 = vld [vmem:[%s3 + $0x18] sm:$0xf]
  %v112 = vld [vmem:[%s3 + $0x1c] sm:$0xf]
  %v113 = vld [vmem:[%s3 + $0x20] sm:$0xf]
  %v114 = vld [vmem:[%s3 + $0x24] sm:$0xf]
  %v115 = vld [vmem:[%s3 + $0x28] sm:$0xf]
  %v116 = vld [vmem:[%s3 + $0x2c] sm:$0xf]
  %v117 = vld [vmem:[%s3 + $0x30] sm:$0xf]
  %v118 = vld [vmem:[%s3 + $0x34] sm:$0xf]
  %v119 = vld [vmem:[%s3 + $0x38] sm:$0xf]
  %v120 = vld [vmem:[%s3 + $0x3c] sm:$0xf]
  %v121 = vld [vmem:[%s4] sm:$0x1]
  %v123 = vlaneseq
  %v124 = vshrl.u32 %v123, 7
  %v125 = vsub.s32 0, %v124
  %v126 = vrot.slane %v121, %v125
  %v144 = vunpack.c.l.b16 %v105
  %v145 = vunpack.c.l.b16 %v106
  %v146 = vunpack.c.l.b16 %v107
  %v147 = vunpack.c.l.b16 %v108
  %v148 = vunpack.c.l.b16 %v109
  %v149 = vunpack.c.l.b16 %v110
  %v150 = vunpack.c.l.b16 %v111
  %v151 = vunpack.c.l.b16 %v112
  %v152 = vunpack.c.l.b16 %v113
  %v153 = vunpack.c.l.b16 %v114
  %v154 = vunpack.c.l.b16 %v115
  %v155 = vunpack.c.l.b16 %v116
  %v156 = vunpack.c.l.b16 %v117
  %v157 = vunpack.c.l.b16 %v118
  %v158 = vunpack.c.l.b16 %v119
  %v159 = vunpack.c.l.b16 %v120
  %v160 = vpack.c.b16 %v145, %v144
  %v161 = vpack.c.b16 %v147, %v146
  %v162 = vpack.c.b16 %v149, %v148
  %v163 = vpack.c.b16 %v151, %v150
  %v164 = vpack.c.b16 %v153, %v152
  %v165 = vpack.c.b16 %v155, %v154
  %v166 = vpack.c.b16 %v157, %v156
  %v167 = vpack.c.b16 %v159, %v158
  %176 = vmatprep.subr.bf16.mxu0 0
  %177 = vmatpush1.bf16.msra.mxu0 %v160
  %178 = vmatprep.subr.bf16.mxu0 0
  %179 = vmatpush1.bf16.msra.mxu0 %v161
  %180 = vmatprep.subr.bf16.mxu0 0
  %181 = vmatpush1.bf16.msra.mxu0 %v162
  %182 = vmatprep.subr.bf16.mxu0 0
  %183 = vmatpush1.bf16.msra.mxu0 %v163
  %184 = vmatprep.subr.bf16.mxu0 0
  %185 = vmatpush1.bf16.msra.mxu0 %v164
  %186 = vmatprep.subr.bf16.mxu0 0
  %187 = vmatpush1.bf16.msra.mxu0 %v165
  %188 = vmatprep.subr.bf16.mxu0 0
  %189 = vmatpush1.bf16.msra.mxu0 %v166
  %190 = vmatprep.subr.bf16.mxu0 0
  %191 = vmatpush1.bf16.msra.mxu0 %v167
  %192 = vmatprep.subr.bf16.mxu0 0
  %193 = vmatpush1.bf16.msra.mxu0 0
  %194 = vmatprep.subr.bf16.mxu0 0
  %195 = vmatpush1.bf16.msra.mxu0 0
  %196 = vmatprep.subr.bf16.mxu0 0
  %197 = vmatpush1.bf16.msra.mxu0 0
  %198 = vmatprep.subr.bf16.mxu0 0
  %199 = vmatpush1.bf16.msra.mxu0 0
  %200 = vmatprep.subr.bf16.mxu0 0
  %201 = vmatpush1.bf16.msra.mxu0 0
  %202 = vmatprep.subr.bf16.mxu0 0
  %203 = vmatpush1.bf16.msra.mxu0 0
  %204 = vmatprep.subr.bf16.mxu0 0
  %205 = vmatpush1.bf16.msra.mxu0 0
  %206 = vmatprep.subr.bf16.mxu0 0
  %207 = vmatpush1.bf16.msra.mxu0 0
  %208 = vmatprep.mubr.bf16.mxu0 0
  %209 = vmatmul.mubr.bf16.gmra.mrb[0].mxu0 %v104
  %v210 = vpop.f32.mrb[0].mxu0
  %v211 = vadd.f32 %v126, %v210
  %v212 = vpop.f32.mrb[0].mxu0
  %v213 = vpop.f32.mrb[0].mxu0
  %v214 = vadd.f32 %v126, %v213
  %v215 = vpop.f32.mrb[0].mxu0
  %216 = vdwg.mxu0
  %v217 = vmax.f32 %v211, 0.0
  %v218 = vmax.f32 %v214, 0.0
  %v219 = vpack.c.bf16 %v218, %v217
  %v220 = vld [vmem:[%s5] sm:$0xf]
  %v221 = vld [vmem:[%s5 + $0x4] sm:$0xf]
  %v222 = vld [vmem:[%s5 + $0x8] sm:$0xf]
  %v223 = vld [vmem:[%s5 + $0xc] sm:$0xf]
  %v224 = vld [vmem:[%s5 + $0x10] sm:$0xf]
  %v225 = vld [vmem:[%s5 + $0x14] sm:$0xf]
  %v226 = vld [vmem:[%s5 + $0x18] sm:$0xf]
  %v227 = vld [vmem:[%s5 + $0x1c] sm:$0xf]
  %v228 = vld [vmem:[%s5 + $0x20] sm:$0xf]
  %v229 = vld [vmem:[%s5 + $0x24] sm:$0xf]
  %v230 = vld [vmem:[%s5 + $0x28] sm:$0xf]
  %v231 = vld [vmem:[%s5 + $0x2c] sm:$0xf]
  %v232 = vld [vmem:[%s5 + $0x30] sm:$0xf]
  %v233 = vld [vmem:[%s5 + $0x34] sm:$0xf]
  %v234 = vld [vmem:[%s5 + $0x38] sm:$0xf]
  %v235 = vld [vmem:[%s5 + $0x3c] sm:$0xf]
  %v236 = vld [vmem:[%s6] sm:$0x1]
  %v238 = vlaneseq
  %v239 = vshrl.u32 %v238, 7
  %v240 = vsub.s32 0, %v239
  %v241 = vrot.slane %v236, %v240
  %v259 = vunpack.c.l.b16 %v220
  %v260 = vunpack.c.l.b16 %v221
  %v261 = vunpack.c.l.b16 %v222
  %v262 = vunpack.c.l.b16 %v223
  %v263 = vunpack.c.l.b16 %v224
  %v264 = vunpack.c.l.b16 %v225
  %v265 = vunpack.c.l.b16 %v226
  %v266 = vunpack.c.l.b16 %v227
  %v267 = vunpack.c.l.b16 %v228
  %v268 = vunpack.c.l.b16 %v229
  %v269 = vunpack.c.l.b16 %v230
  %v270 = vunpack.c.l.b16 %v231
  %v271 = vunpack.c.l.b16 %v232
  %v272 = vunpack.c.l.b16 %v233
  %v273 = vunpack.c.l.b16 %v234
  %v274 = vunpack.c.l.b16 %v235
  %v275 = vpack.c.b16 %v260, %v259
  %v276 = vpack.c.b16 %v262, %v261
  %v277 = vpack.c.b16 %v264, %v263
  %v278 = vpack.c.b16 %v266, %v265
  %v279 = vpack.c.b16 %v268, %v267
  %v280 = vpack.c.b16 %v270, %v269
  %v281 = vpack.c.b16 %v272, %v271
  %v282 = vpack.c.b16 %v274, %v273
  %291 = vmatprep.subr.bf16.mxu0 0
  %292 = vmatpush1.bf16.msra.mxu0 %v275
  %293 = vmatprep.subr.bf16.mxu0 0
  %294 = vmatpush1.bf16.msra.mxu0 %v276
  %295 = vmatprep.subr.bf16.mxu0 0
  %296 = vmatpush1.bf16.msra.mxu0 %v277
  %297 = vmatprep.subr.bf16.mxu0 0
  %298 = vmatpush1.bf16.msra.mxu0 %v278
  %299 = vmatprep.subr.bf16.mxu0 0
  %300 = vmatpush1.bf16.msra.mxu0 %v279
  %301 = vmatprep.subr.bf16.mxu0 0
  %302 = vmatpush1.bf16.msra.mxu0 %v280
  %303 = vmatprep.subr.bf16.mxu0 0
  %304 = vmatpush1.bf16.msra.mxu0 %v281
  %305 = vmatprep.subr.bf16.mxu0 0
  %306 = vmatpush1.bf16.msra.mxu0 %v282
  %307 = vmatprep.subr.bf16.mxu0 0
  %308 = vmatpush1.bf16.msra.mxu0 0
  %309 = vmatprep.subr.bf16.mxu0 0
  %310 = vmatpush1.bf16.msra.mxu0 0
  %311 = vmatprep.subr.bf16.mxu0 0
  %312 = vmatpush1.bf16.msra.mxu0 0
  %313 = vmatprep.subr.bf16.mxu0 0
  %314 = vmatpush1.bf16.msra.mxu0 0
  %315 = vmatprep.subr.bf16.mxu0 0
  %316 = vmatpush1.bf16.msra.mxu0 0
  %317 = vmatprep.subr.bf16.mxu0 0
  %318 = vmatpush1.bf16.msra.mxu0 0
  %319 = vmatprep.subr.bf16.mxu0 0
  %320 = vmatpush1.bf16.msra.mxu0 0
  %321 = vmatprep.subr.bf16.mxu0 0
  %322 = vmatpush1.bf16.msra.mxu0 0
  %323 = vmatprep.mubr.bf16.mxu0 0
  %324 = vmatmul.mubr.bf16.gmra.mrb[0].mxu0 %v219
  %v325 = vpop.f32.mrb[0].mxu0
  %v326 = vadd.f32 %v241, %v325
  %v327 = vpop.f32.mrb[0].mxu0
  %v328 = vpop.f32.mrb[0].mxu0
  %v329 = vadd.f32 %v241, %v328
  %v330 = vpop.f32.mrb[0].mxu0
  %331 = vdwg.mxu0
  %v332 = vpack.c.bf16 %v329, %v326
  %v334 = vunpack.c.l.b16 %v332
  %v335 = vunpack.c.h.b16 %v332
  %v336 = vpack.c.b16 %v334, %v334
  %v337 = vpack.c.b16 %v335, %v335
  %340 = vst [vmem:[%s7] sm:$0xf] %v336
  %341 = vst [vmem:[%s7 + $0x4] sm:$0xf] %v337
  // Predicated region
  $region30: #{cutsnet_forward.1} parent=0 // pred_check
    _
  $region31: #{cutsnet_forward.1} parent=0 // pred_check_branch
    %343 = sbr.rel (0) target = $region33
  $region32: #{cutsnet_forward.1} parent=0 // pred_region
    _
  $region33: #{cutsnet_forward.1} parent=0 // pred_fallthru
    _
  // Predicated region
  $region34: #{cutsnet_forward.1} parent=0 // pred_check
    _
  $region35: #{cutsnet_forward.1} parent=0 // pred_check_branch
    %345 = sbr.rel (0) target = $region37
  $region36: #{cutsnet_forward.1} parent=0 // pred_region
    _
  $region37: #{cutsnet_forward.1} parent=0 // pred_fallthru
    _

</llo_original>
